<compile_context>
chip_gen: v7x
topology: tpu7x:2x2x1
jax: 0.10.0
libtpu: 0.0.40
codegen_flags: <defaults>
</compile_context>

<pallas_src>
import functools

import jax
import jax.numpy as jnp
from jax.experimental import pallas as pl
from jax.experimental.pallas import tpu as pltpu


def _scorer_kernel(T, bev_ref, w1_ref, b1_ref, w2_ref, b2_ref, out_ref):
    # bev_ref: (M, T, D) f32, M = B*P.  T-max over the middle axis, done in f32
    # (pure element-wise VPU maxes; no bf16-VALU dependence, so v5e is happy).
    if T <= 16:
        pf = bev_ref[:, 0, :]
        for t in range(1, T):
            pf = jnp.maximum(pf, bev_ref[:, t, :])
    else:
        # Future-proofing for large T: let the compiler handle the reduction.
        pf = jnp.max(bev_ref[...], axis=1)

    # Cast the pooled feature to bf16 once, just before the MXU.
    pf = pf.astype(jnp.bfloat16)

    # Fused first layers of both heads: (M, D) x (D, 2F) -> (M, 2F), 2F = 128.
    h = jnp.dot(pf, w1_ref[...], preferred_element_type=jnp.float32) + b1_ref[...]
    h = jnp.maximum(h, 0.0).astype(jnp.bfloat16)

    # Fused (block-diagonal, zero-padded to 128 lanes) second layers:
    # (M, 2F) x (2F, NPAD) -> (M, NPAD), bf16 x bf16 -> f32 acc.
    o = jnp.dot(h, w2_ref[...], preferred_element_type=jnp.float32) + b2_ref[...]
    out_ref[...] = o.astype(out_ref.dtype)


def prepare_scorer_params(params):
    """One-time (model-load) fusion of the two score-head MLPs.

    layer 1:  W1 = [w1a | w1b]            -> (D, 2F), bf16   (2F = 128, lane-dense)
    layer 2:  W2 = blockdiag(w2a, w2b)    -> (2F, NPAD), bf16, zero-padded to 128 lanes
    Biases stay f32 (added to the f32 MXU accumulator; negligible footprint).
    """
    F = params["w1a"].shape[1]
    S = params["w2a"].shape[1]          # score_num == 6
    NPAD = pl.cdiv(2 * S, 128) * 128    # lane-dense padded output width

    w1 = jnp.concatenate([params["w1a"], params["w1b"]], axis=1).astype(jnp.bfloat16)
    b1 = jnp.concatenate([params["b1a"], params["b1b"]], axis=1).astype(jnp.float32)

    w2 = jnp.zeros((2 * F, NPAD), jnp.float32)
    w2 = w2.at[:F, :S].set(params["w2a"]).at[F:, S:2 * S].set(params["w2b"])
    w2 = w2.astype(jnp.bfloat16)

    b2 = jnp.zeros((1, NPAD), jnp.float32)
    b2 = b2.at[:, :S].set(params["b2a"]).at[:, S:2 * S].set(params["b2b"])

    return {"w1": w1, "b1": b1, "w2": w2, "b2": b2, "score_num": S, "npad": NPAD}


def scorer_forward(proposals, bev_feature, fused):
    """Eval-mode Scorer.forward (double_score=True config).

    proposals:    (B, P, T, ...)  -- only shapes are used (as in the reference)
    bev_feature:  (B*P*T, D)  (rows ordered (B, P, T) row-major, as in reference)
    fused:        output of prepare_scorer_params (precomputed once)
    returns: (pred_logit, pred_logit2, None, None, None, None, None)
    """
    B, P, T = proposals.shape[0], proposals.shape[1], proposals.shape[2]
    D = bev_feature.shape[-1]
    S = fused["score_num"]
    NPAD = fused["npad"]
    M = B * P

    # Metadata-only reshape; bev stays f32 and is the only per-call wrapper op.
    bev = bev_feature.reshape(M, T, D)

    F2 = fused["w1"].shape[1]  # = 2F = 128
    flops = 2 * M * (D * F2 + F2 * NPAD)
    bytes_accessed = (
        bev.size * bev.dtype.itemsize
        + fused["w1"].size * 2 + fused["w2"].size * 2
        + fused["b1"].size * 4 + fused["b2"].size * 4
        + M * NPAD * 4
    )

    vmem = pl.BlockSpec(memory_space=pltpu.MemorySpace.VMEM)
    out = pl.pallas_call(
        functools.partial(_scorer_kernel, T),
        out_shape=jax.ShapeDtypeStruct((M, NPAD), jnp.float32),
        in_specs=[vmem, vmem, vmem, vmem, vmem],
        out_specs=vmem,
        cost_estimate=pl.CostEstimate(
            flops=flops, transcendentals=0, bytes_accessed=bytes_accessed),
    )(bev, fused["w1"], fused["b1"], fused["w2"], fused["b2"])

    pred_logit = out[:, :S].reshape(B, -1, S)
    pred_logit2 = out[:, S:2 * S].reshape(B, -1, S)
    # training-only outputs are None in eval mode
    return (pred_logit, pred_logit2, None, None, None, None, None)


def _init_params(key, d_model, d_ffn, score_num):
    ks = jax.random.split(key, 8)
    sc1 = 1.0 / jnp.sqrt(d_model)
    sc2 = 1.0 / jnp.sqrt(d_ffn)
    return {
        "w1a": jax.random.uniform(ks[0], (d_model, d_ffn), jnp.float32, -sc1, sc1),
        "b1a": jax.random.uniform(ks[1], (1, d_ffn), jnp.float32, -sc1, sc1),
        "w2a": jax.random.uniform(ks[2], (d_ffn, score_num), jnp.float32, -sc2, sc2),
        "b2a": jax.random.uniform(ks[3], (1, score_num), jnp.float32, -sc2, sc2),
        "w1b": jax.random.uniform(ks[4], (d_model, d_ffn), jnp.float32, -sc1, sc1),
        "b1b": jax.random.uniform(ks[5], (1, d_ffn), jnp.float32, -sc1, sc1),
        "w2b": jax.random.uniform(ks[6], (d_ffn, score_num), jnp.float32, -sc2, sc2),
        "b2b": jax.random.uniform(ks[7], (1, score_num), jnp.float32, -sc2, sc2),
    }


def _ref_forward(bev, params, B, P, T, S):
    # Faithful f32 reference of the PyTorch forward (eval mode, double_score).
    D = params["w1a"].shape[0]
    pf = bev.reshape(B, P, T, D).max(axis=2)

    def mlp(x, w1, b1, w2, b2):
        return jnp.maximum(x @ w1 + b1[0], 0.0) @ w2 + b2[0]

    o1 = mlp(pf, params["w1a"], params["b1a"], params["w2a"], params["b2a"])
    o2 = mlp(pf, params["w1b"], params["b1b"], params["w2b"], params["b2b"])
    return o1.reshape(B, -1, S), o2.reshape(B, -1, S)


if __name__ == "__main__":
    B, P, T = 2, 8, 8          # batch, proposal_num, trajectory length
    D_MODEL, D_FFN, SCORE_NUM = 32, 64, 6

    key = jax.random.PRNGKey(0)
    k_prop, k_bev, k_par = jax.random.split(key, 3)

    # proposals: only shape (B, P, T, ...) matters to the forward
    proposals = jax.random.normal(k_prop, (B, P, T, 3), jnp.float32)
    # bev_feature arrives flattened as (B*P*T, D) in the reference usage
    bev_feature = jax.random.normal(k_bev, (B * P * T, D_MODEL), jnp.float32)

    params = _init_params(k_par, D_MODEL, D_FFN, SCORE_NUM)

    # One-time weight fusion (model-load time) -- hoisted out of the call path.
    fused = prepare_scorer_params(params)
    fused = jax.tree_util.tree_map(
        lambda x: jax.block_until_ready(x) if isinstance(x, jax.Array) else x, fused)

    outs = scorer_forward(proposals, bev_feature, fused)
    pred_logit, pred_logit2 = outs[0], outs[1]
    jax.block_until_ready(pred_logit)
    jax.block_until_ready(pred_logit2)

    ref1, ref2 = _ref_forward(bev_feature, params, B, P, T, SCORE_NUM)
    assert pred_logit.shape == (B, P, SCORE_NUM)
    assert pred_logit2.shape == (B, P, SCORE_NUM)
    # bf16 matmul operands in the kernel vs. f32 reference -> loosened tolerance.
    assert jnp.allclose(pred_logit, ref1, atol=5e-2, rtol=5e-2)
    assert jnp.allclose(pred_logit2, ref2, atol=5e-2, rtol=5e-2)
    assert all(o is None for o in outs[2:])

    print("KERNEL_OK")
</pallas_src>

<mosaic_0001>
module attributes {stable_mosaic.version = 11 : i64} {
  func.func @_scorer_kernel(%arg0: memref<16x8x32xf32, #tpu.memory_space<vmem>>, %arg1: memref<32x128xbf16, #tpu.memory_space<vmem>>, %arg2: memref<1x128xf32, #tpu.memory_space<vmem>>, %arg3: memref<128x128xbf16, #tpu.memory_space<vmem>>, %arg4: memref<1x128xf32, #tpu.memory_space<vmem>>, %arg5: memref<16x128xf32, #tpu.memory_space<vmem>>) attributes {dimension_semantics = [], scalar_prefetch = 0 : i64, scratch_operands = 0 : i64, tpu.core_type = #tpu.core_type<tc>} {
    %c0 = arith.constant 0 : index
    %c0_0 = arith.constant 0 : index
    %c0_1 = arith.constant 0 : index
    %0 = vector.load %arg0[%c0, %c0_0, %c0_1] : memref<16x8x32xf32, #tpu.memory_space<vmem>>, vector<16x1x32xf32>
    %1 = vector.shape_cast %0 : vector<16x1x32xf32> to vector<16x32xf32>
    %c0_2 = arith.constant 0 : index
    %c1 = arith.constant 1 : index
    %c0_3 = arith.constant 0 : index
    %2 = vector.load %arg0[%c0_2, %c1, %c0_3] : memref<16x8x32xf32, #tpu.memory_space<vmem>>, vector<16x1x32xf32>
    %3 = vector.shape_cast %2 : vector<16x1x32xf32> to vector<16x32xf32>
    %4 = arith.maximumf %1, %3 : vector<16x32xf32>
    %c0_4 = arith.constant 0 : index
    %c2 = arith.constant 2 : index
    %c0_5 = arith.constant 0 : index
    %5 = vector.load %arg0[%c0_4, %c2, %c0_5] : memref<16x8x32xf32, #tpu.memory_space<vmem>>, vector<16x1x32xf32>
    %6 = vector.shape_cast %5 : vector<16x1x32xf32> to vector<16x32xf32>
    %7 = arith.maximumf %4, %6 : vector<16x32xf32>
    %c0_6 = arith.constant 0 : index
    %c3 = arith.constant 3 : index
    %c0_7 = arith.constant 0 : index
    %8 = vector.load %arg0[%c0_6, %c3, %c0_7] : memref<16x8x32xf32, #tpu.memory_space<vmem>>, vector<16x1x32xf32>
    %9 = vector.shape_cast %8 : vector<16x1x32xf32> to vector<16x32xf32>
    %10 = arith.maximumf %7, %9 : vector<16x32xf32>
    %c0_8 = arith.constant 0 : index
    %c4 = arith.constant 4 : index
    %c0_9 = arith.constant 0 : index
    %11 = vector.load %arg0[%c0_8, %c4, %c0_9] : memref<16x8x32xf32, #tpu.memory_space<vmem>>, vector<16x1x32xf32>
    %12 = vector.shape_cast %11 : vector<16x1x32xf32> to vector<16x32xf32>
    %13 = arith.maximumf %10, %12 : vector<16x32xf32>
    %c0_10 = arith.constant 0 : index
    %c5 = arith.constant 5 : index
    %c0_11 = arith.constant 0 : index
    %14 = vector.load %arg0[%c0_10, %c5, %c0_11] : memref<16x8x32xf32, #tpu.memory_space<vmem>>, vector<16x1x32xf32>
    %15 = vector.shape_cast %14 : vector<16x1x32xf32> to vector<16x32xf32>
    %16 = arith.maximumf %13, %15 : vector<16x32xf32>
    %c0_12 = arith.constant 0 : index
    %c6 = arith.constant 6 : index
    %c0_13 = arith.constant 0 : index
    %17 = vector.load %arg0[%c0_12, %c6, %c0_13] : memref<16x8x32xf32, #tpu.memory_space<vmem>>, vector<16x1x32xf32>
    %18 = vector.shape_cast %17 : vector<16x1x32xf32> to vector<16x32xf32>
    %19 = arith.maximumf %16, %18 : vector<16x32xf32>
    %c0_14 = arith.constant 0 : index
    %c7 = arith.constant 7 : index
    %c0_15 = arith.constant 0 : index
    %20 = vector.load %arg0[%c0_14, %c7, %c0_15] : memref<16x8x32xf32, #tpu.memory_space<vmem>>, vector<16x1x32xf32>
    %21 = vector.shape_cast %20 : vector<16x1x32xf32> to vector<16x32xf32>
    %22 = arith.maximumf %19, %21 : vector<16x32xf32>
    %23 = arith.truncf %22 : vector<16x32xf32> to vector<16x32xbf16>
    %c0_16 = arith.constant 0 : index
    %c0_17 = arith.constant 0 : index
    %24 = vector.load %arg1[%c0_16, %c0_17] : memref<32x128xbf16, #tpu.memory_space<vmem>>, vector<32x128xbf16>
    %cst = arith.constant dense<0.000000e+00> : vector<16x128xf32>
    %25 = tpu.matmul %23, %24, %cst {dimension_numbers = #tpu.dot_dimension_numbers<[1], [0], [0], [1], [0, 0, 1, 1], [], []>} : vector<16x32xbf16>, vector<32x128xbf16>, vector<16x128xf32> -> vector<16x128xf32>
    %c0_18 = arith.constant 0 : index
    %c0_19 = arith.constant 0 : index
    %26 = vector.load %arg2[%c0_18, %c0_19] : memref<1x128xf32, #tpu.memory_space<vmem>>, vector<1x128xf32>
    %27 = vector.broadcast %26 : vector<1x128xf32> to vector<16x128xf32>
    %28 = arith.addf %25, %27 : vector<16x128xf32>
    %cst_20 = arith.constant 0.000000e+00 : f32
    %29 = vector.broadcast %cst_20 : f32 to vector<16x128xf32>
    %30 = arith.maximumf %28, %29 : vector<16x128xf32>
    %31 = arith.truncf %30 : vector<16x128xf32> to vector<16x128xbf16>
    %c0_21 = arith.constant 0 : index
    %c0_22 = arith.constant 0 : index
    %32 = vector.load %arg3[%c0_21, %c0_22] : memref<128x128xbf16, #tpu.memory_space<vmem>>, vector<128x128xbf16>
    %cst_23 = arith.constant dense<0.000000e+00> : vector<16x128xf32>
    %33 = tpu.matmul %31, %32, %cst_23 {dimension_numbers = #tpu.dot_dimension_numbers<[1], [0], [0], [1], [0, 0, 1, 1], [], []>} : vector<16x128xbf16>, vector<128x128xbf16>, vector<16x128xf32> -> vector<16x128xf32>
    %c0_24 = arith.constant 0 : index
    %c0_25 = arith.constant 0 : index
    %34 = vector.load %arg4[%c0_24, %c0_25] : memref<1x128xf32, #tpu.memory_space<vmem>>, vector<1x128xf32>
    %35 = vector.broadcast %34 : vector<1x128xf32> to vector<16x128xf32>
    %36 = arith.addf %33, %35 : vector<16x128xf32>
    %c0_26 = arith.constant 0 : index
    %c0_27 = arith.constant 0 : index
    %37 = vector.load %arg5[%c0_26, %c0_27] : memref<16x128xf32, #tpu.memory_space<vmem>>, vector<16x128xf32>
    tpu.vector_store %arg5[%c0_26, %c0_27], %36 {strides = array<i32>} : memref<16x128xf32, #tpu.memory_space<vmem>>, vector<16x128xf32>,
    return
  }
}

</mosaic_0001>

<llo_original>
// kernel: tpu_custom_call.1
$region0: #{tpu_custom_call.1}
  #allocation0 [shape = 'u32[]', space=smem, size = 0x4, offset = 0x4, fixed_abs, tag = 'smem constant byte address 0x4 - core index']
  #allocation1 [shape = 'u32[144,128]{1,0:T(1,128)}', space=vmem, size = 0x12000, scoped, tag = 'internal scratch']
  %s0 = inlined_call_operand.hbm [shape: f32[16,8,32], index: 0, kind: input, shape index: {}]
  %s1 = inlined_call_operand.hbm [shape: bf16[32,128], index: 1, kind: input, shape index: {}]
  %s2 = inlined_call_operand.vmem [shape: f32[1,128], index: 2, kind: input, shape index: {}]
  %s3 = inlined_call_operand.hbm [shape: bf16[128,128], index: 3, kind: input, shape index: {}]
  %s4 = inlined_call_operand.vmem [shape: f32[1,128], index: 4, kind: input, shape index: {}]
  %s5 = inlined_call_operand.hbm [shape: f32[16,128], index: 5, kind: output, shape index: {}]
  %s6 = sld [smem:[#allocation0]]
  $region42: #{tpu_custom_call.1} parent=0
    _
  %s8 = ssub.s32 1, %s6
  %s9 = scalar_select 0, %s8, %s6
  $region1: #{tpu_custom_call.1} parent=0
    #allocation2 [shape = 'u8[65536]{0}', space=vmem, size = 0x10000, scoped, tag = 'input window, operand 0, single buffered']
    #allocation3 [shape = 's32[1]{0}', space=sflag, size = 0x4, scoped, tag = 'scoped memory for tpu_custom_call.1']
    #allocation4 [shape = 's32[1]{0}', space=sflag, size = 0x4, scoped, tag = 'scoped memory for tpu_custom_call.1']
    #allocation5 [shape = 'u8[8192]{0}', space=vmem, size = 0x2000, scoped, tag = 'input window, operand 1, single buffered']
    #allocation6 [shape = 's32[1]{0}', space=sflag, size = 0x4, scoped, tag = 'scoped memory for tpu_custom_call.1']
    #allocation7 [shape = 'u8[32768]{0}', space=vmem, size = 0x8000, scoped, tag = 'input window, operand 3, single buffered']
    #allocation8 [shape = 'u8[8192]{0}', space=vmem, size = 0x2000, scoped, tag = 'output window, operand 0, single buffered']
    %10 = vsyncpa [#allocation3], 0
    %11 = vsyncpa [#allocation6], 0
    %12 = vsyncpa [#allocation4], 0
    // Predicated region
    $region2: #{tpu_custom_call.1} parent=1 // pred_check
      _
    $region3: #{tpu_custom_call.1} parent=1 // pred_check_branch
      %14 = sbr.rel (0) target = $region5
    $region4: #{tpu_custom_call.1} parent=1 // pred_region
      %s16 = ssub.s32 2048, 2048
      %17 = vsyncadd [#allocation3], %s16
      %s18 = sshll.u32 [#allocation2], 4
      %s19 = int_to_ptr.vmem [resolvable:$true] %s18
      %24 = dma.hbm_to_vmem [thread:$0]  %s0, 2048, %s19, [#allocation3], 128, 128, 8
    $region5: #{tpu_custom_call.1} parent=1 // pred_fallthru
      _
    // Predicated region
    $region6: #{tpu_custom_call.1} parent=1 // pred_check
      _
    $region7: #{tpu_custom_call.1} parent=1 // pred_check_branch
      %26 = sbr.rel (0) target = $region9
    $region8: #{tpu_custom_call.1} parent=1 // pred_region
      %s28 = ssub.s32 256, 256
      %29 = vsyncadd [#allocation6], %s28
      %s30 = sshll.u32 [#allocation5], 4
      %s31 = int_to_ptr.vmem [resolvable:$true] %s30
      %36 = dma.hbm_to_vmem [thread:$0]  %s1, 256, %s31, [#allocation6], 64, 64, 4
    $region9: #{tpu_custom_call.1} parent=1 // pred_fallthru
      _
    // Predicated region
    $region10: #{tpu_custom_call.1} parent=1 // pred_check
      _
    $region11: #{tpu_custom_call.1} parent=1 // pred_check_branch
      %38 = sbr.rel (0) target = $region13
    $region12: #{tpu_custom_call.1} parent=1 // pred_region
      _
    $region13: #{tpu_custom_call.1} parent=1 // pred_fallthru
      _
    // Predicated region
    $region14: #{tpu_custom_call.1} parent=1 // pred_check
      _
    $region15: #{tpu_custom_call.1} parent=1 // pred_check_branch
      %40 = sbr.rel (0) target = $region17
    $region16: #{tpu_custom_call.1} parent=1 // pred_region
      %s42 = ssub.s32 1024, 1024
      %43 = vsyncadd [#allocation6], %s42
      %s44 = sshll.u32 [#allocation7], 4
      %s45 = int_to_ptr.vmem [resolvable:$true] %s44
      %50 = dma.hbm_to_vmem [thread:$0]  %s3, 1024, %s45, [#allocation6], 64, 64, 4
    $region17: #{tpu_custom_call.1} parent=1 // pred_fallthru
      _
    // Predicated region
    $region18: #{tpu_custom_call.1} parent=1 // pred_check
      _
    $region19: #{tpu_custom_call.1} parent=1 // pred_check_branch
      %52 = sbr.rel (0) target = $region21
    $region20: #{tpu_custom_call.1} parent=1 // pred_region
      _
    $region21: #{tpu_custom_call.1} parent=1 // pred_fallthru
      _
    // Predicated region
    $region22: #{tpu_custom_call.1} parent=1 // pred_check
      _
    $region23: #{tpu_custom_call.1} parent=1 // pred_check_branch
      %54 = sbr.rel (0) target = $region25
    $region24: #{tpu_custom_call.1} parent=1 // pred_region
      %55 = dma.done [#allocation3], 2048
    $region25: #{tpu_custom_call.1} parent=1 // pred_fallthru
      _
    // Predicated region
    $region26: #{tpu_custom_call.1} parent=1 // pred_check
      _
    $region27: #{tpu_custom_call.1} parent=1 // pred_check_branch
      %57 = sbr.rel (0) target = $region29
    $region28: #{tpu_custom_call.1} parent=1 // pred_region
      %58 = dma.done [#allocation6], 256
    $region29: #{tpu_custom_call.1} parent=1 // pred_fallthru
      _
    // Predicated region
    $region30: #{tpu_custom_call.1} parent=1 // pred_check
      _
    $region31: #{tpu_custom_call.1} parent=1 // pred_check_branch
      %60 = sbr.rel (0) target = $region33
    $region32: #{tpu_custom_call.1} parent=1 // pred_region
      %61 = dma.done [#allocation6], 1024
    $region33: #{tpu_custom_call.1} parent=1 // pred_fallthru
      _
    %v63 = vld [vmem:[#allocation2] sm:$0x1]
    %v64 = vld [vmem:[#allocation2 + $0x8] sm:$0x1]
    %v65 = vld [vmem:[#allocation2 + $0x10] sm:$0x1]
    %v66 = vld [vmem:[#allocation2 + $0x18] sm:$0x1]
    %v67 = vld [vmem:[#allocation2 + $0x20] sm:$0x1]
    %v68 = vld [vmem:[#allocation2 + $0x28] sm:$0x1]
    %v69 = vld [vmem:[#allocation2 + $0x30] sm:$0x1]
    %v70 = vld [vmem:[#allocation2 + $0x38] sm:$0x1]
    %v71 = vld [vmem:[#allocation2 + $0x40] sm:$0x1]
    %v72 = vld [vmem:[#allocation2 + $0x48] sm:$0x1]
    %v73 = vld [vmem:[#allocation2 + $0x50] sm:$0x1]
    %v74 = vld [vmem:[#allocation2 + $0x58] sm:$0x1]
    %v75 = vld [vmem:[#allocation2 + $0x60] sm:$0x1]
    %v76 = vld [vmem:[#allocation2 + $0x68] sm:$0x1]
    %v77 = vld [vmem:[#allocation2 + $0x70] sm:$0x1]
    %v78 = vld [vmem:[#allocation2 + $0x78] sm:$0x1]
    %v79 = vld [vmem:[#allocation2 + $0x1] sm:$0x1]
    %v80 = vld [vmem:[#allocation2 + $0x9] sm:$0x1]
    %v81 = vld [vmem:[#allocation2 + $0x11] sm:$0x1]
    %v82 = vld [vmem:[#allocation2 + $0x19] sm:$0x1]
    %v83 = vld [vmem:[#allocation2 + $0x21] sm:$0x1]
    %v84 = vld [vmem:[#allocation2 + $0x29] sm:$0x1]
    %v85 = vld [vmem:[#allocation2 + $0x31] sm:$0x1]
    %v86 = vld [vmem:[#allocation2 + $0x39] sm:$0x1]
    %v87 = vld [vmem:[#allocation2 + $0x41] sm:$0x1]
    %v88 = vld [vmem:[#allocation2 + $0x49] sm:$0x1]
    %v89 = vld [vmem:[#allocation2 + $0x51] sm:$0x1]
    %v90 = vld [vmem:[#allocation2 + $0x59] sm:$0x1]
    %v91 = vld [vmem:[#allocation2 + $0x61] sm:$0x1]
    %v92 = vld [vmem:[#allocation2 + $0x69] sm:$0x1]
    %v93 = vld [vmem:[#allocation2 + $0x71] sm:$0x1]
    %v94 = vld [vmem:[#allocation2 + $0x79] sm:$0x1]
    %v95 = vmax.f32 %v63, %v79
    %v96 = vmax.f32 %v64, %v80
    %v97 = vmax.f32 %v65, %v81
    %v98 = vmax.f32 %v66, %v82
    %v99 = vmax.f32 %v67, %v83
    %v100 = vmax.f32 %v68, %v84
    %v101 = vmax.f32 %v69, %v85
    %v102 = vmax.f32 %v70, %v86
    %v103 = vmax.f32 %v71, %v87
    %v104 = vmax.f32 %v72, %v88
    %v105 = vmax.f32 %v73, %v89
    %v106 = vmax.f32 %v74, %v90
    %v107 = vmax.f32 %v75, %v91
    %v108 = vmax.f32 %v76, %v92
    %v109 = vmax.f32 %v77, %v93
    %v110 = vmax.f32 %v78, %v94
    %v111 = vld [vmem:[#allocation2 + $0x2] sm:$0x1]
    %v112 = vld [vmem:[#allocation2 + $0xa] sm:$0x1]
    %v113 = vld [vmem:[#allocation2 + $0x12] sm:$0x1]
    %v114 = vld [vmem:[#allocation2 + $0x1a] sm:$0x1]
    %v115 = vld [vmem:[#allocation2 + $0x22] sm:$0x1]
    %v116 = vld [vmem:[#allocation2 + $0x2a] sm:$0x1]
    %v117 = vld [vmem:[#allocation2 + $0x32] sm:$0x1]
    %v118 = vld [vmem:[#allocation2 + $0x3a] sm:$0x1]
    %v119 = vld [vmem:[#allocation2 + $0x42] sm:$0x1]
    %v120 = vld [vmem:[#allocation2 + $0x4a] sm:$0x1]
    %v121 = vld [vmem:[#allocation2 + $0x52] sm:$0x1]
    %v122 = vld [vmem:[#allocation2 + $0x5a] sm:$0x1]
    %v123 = vld [vmem:[#allocation2 + $0x62] sm:$0x1]
    %v124 = vld [vmem:[#allocation2 + $0x6a] sm:$0x1]
    %v125 = vld [vmem:[#allocation2 + $0x72] sm:$0x1]
    %v126 = vld [vmem:[#allocation2 + $0x7a] sm:$0x1]
    %v127 = vmax.f32 %v95, %v111
    %v128 = vmax.f32 %v96, %v112
    %v129 = vmax.f32 %v97, %v113
    %v130 = vmax.f32 %v98, %v114
    %v131 = vmax.f32 %v99, %v115
    %v132 = vmax.f32 %v100, %v116
    %v133 = vmax.f32 %v101, %v117
    %v134 = vmax.f32 %v102, %v118
    %v135 = vmax.f32 %v103, %v119
    %v136 = vmax.f32 %v104, %v120
    %v137 = vmax.f32 %v105, %v121
    %v138 = vmax.f32 %v106, %v122
    %v139 = vmax.f32 %v107, %v123
    %v140 = vmax.f32 %v108, %v124
    %v141 = vmax.f32 %v109, %v125
    %v142 = vmax.f32 %v110, %v126
    %v143 = vld [vmem:[#allocation2 + $0x3] sm:$0x1]
    %v144 = vld [vmem:[#allocation2 + $0xb] sm:$0x1]
    %v145 = vld [vmem:[#allocation2 + $0x13] sm:$0x1]
    %v146 = vld [vmem:[#allocation2 + $0x1b] sm:$0x1]
    %v147 = vld [vmem:[#allocation2 + $0x23] sm:$0x1]
    %v148 = vld [vmem:[#allocation2 + $0x2b] sm:$0x1]
    %v149 = vld [vmem:[#allocation2 + $0x33] sm:$0x1]
    %v150 = vld [vmem:[#allocation2 + $0x3b] sm:$0x1]
    %v151 = vld [vmem:[#allocation2 + $0x43] sm:$0x1]
    %v152 = vld [vmem:[#allocation2 + $0x4b] sm:$0x1]
    %v153 = vld [vmem:[#allocation2 + $0x53] sm:$0x1]
    %v154 = vld [vmem:[#allocation2 + $0x5b] sm:$0x1]
    %v155 = vld [vmem:[#allocation2 + $0x63] sm:$0x1]
    %v156 = vld [vmem:[#allocation2 + $0x6b] sm:$0x1]
    %v157 = vld [vmem:[#allocation2 + $0x73] sm:$0x1]
    %v158 = vld [vmem:[#allocation2 + $0x7b] sm:$0x1]
    %v159 = vmax.f32 %v127, %v143
    %v160 = vmax.f32 %v128, %v144
    %v161 = vmax.f32 %v129, %v145
    %v162 = vmax.f32 %v130, %v146
    %v163 = vmax.f32 %v131, %v147
    %v164 = vmax.f32 %v132, %v148
    %v165 = vmax.f32 %v133, %v149
    %v166 = vmax.f32 %v134, %v150
    %v167 = vmax.f32 %v135, %v151
    %v168 = vmax.f32 %v136, %v152
    %v169 = vmax.f32 %v137, %v153
    %v170 = vmax.f32 %v138, %v154
    %v171 = vmax.f32 %v139, %v155
    %v172 = vmax.f32 %v140, %v156
    %v173 = vmax.f32 %v141, %v157
    %v174 = vmax.f32 %v142, %v158
    %v175 = vld [vmem:[#allocation2 + $0x4] sm:$0x1]
    %v176 = vld [vmem:[#allocation2 + $0xc] sm:$0x1]
    %v177 = vld [vmem:[#allocation2 + $0x14] sm:$0x1]
    %v178 = vld [vmem:[#allocation2 + $0x1c] sm:$0x1]
    %v179 = vld [vmem:[#allocation2 + $0x24] sm:$0x1]
    %v180 = vld [vmem:[#allocation2 + $0x2c] sm:$0x1]
    %v181 = vld [vmem:[#allocation2 + $0x34] sm:$0x1]
    %v182 = vld [vmem:[#allocation2 + $0x3c] sm:$0x1]
    %v183 = vld [vmem:[#allocation2 + $0x44] sm:$0x1]
    %v184 = vld [vmem:[#allocation2 + $0x4c] sm:$0x1]
    %v185 = vld [vmem:[#allocation2 + $0x54] sm:$0x1]
    %v186 = vld [vmem:[#allocation2 + $0x5c] sm:$0x1]
    %v187 = vld [vmem:[#allocation2 + $0x64] sm:$0x1]
    %v188 = vld [vmem:[#allocation2 + $0x6c] sm:$0x1]
    %v189 = vld [vmem:[#allocation2 + $0x74] sm:$0x1]
    %v190 = vld [vmem:[#allocation2 + $0x7c] sm:$0x1]
    %v191 = vmax.f32 %v159, %v175
    %v192 = vmax.f32 %v160, %v176
    %v193 = vmax.f32 %v161, %v177
    %v194 = vmax.f32 %v162, %v178
    %v195 = vmax.f32 %v163, %v179
    %v196 = vmax.f32 %v164, %v180
    %v197 = vmax.f32 %v165, %v181
    %v198 = vmax.f32 %v166, %v182
    %v199 = vmax.f32 %v167, %v183
    %v200 = vmax.f32 %v168, %v184
    %v201 = vmax.f32 %v169, %v185
    %v202 = vmax.f32 %v170, %v186
    %v203 = vmax.f32 %v171, %v187
    %v204 = vmax.f32 %v172, %v188
    %v205 = vmax.f32 %v173, %v189
    %v206 = vmax.f32 %v174, %v190
    %v207 = vld [vmem:[#allocation2 + $0x5] sm:$0x1]
    %v208 = vld [vmem:[#allocation2 + $0xd] sm:$0x1]
    %v209 = vld [vmem:[#allocation2 + $0x15] sm:$0x1]
    %v210 = vld [vmem:[#allocation2 + $0x1d] sm:$0x1]
    %v211 = vld [vmem:[#allocation2 + $0x25] sm:$0x1]
    %v212 = vld [vmem:[#allocation2 + $0x2d] sm:$0x1]
    %v213 = vld [vmem:[#allocation2 + $0x35] sm:$0x1]
    %v214 = vld [vmem:[#allocation2 + $0x3d] sm:$0x1]
    %v215 = vld [vmem:[#allocation2 + $0x45] sm:$0x1]
    %v216 = vld [vmem:[#allocation2 + $0x4d] sm:$0x1]
    %v217 = vld [vmem:[#allocation2 + $0x55] sm:$0x1]
    %v218 = vld [vmem:[#allocation2 + $0x5d] sm:$0x1]
    %v219 = vld [vmem:[#allocation2 + $0x65] sm:$0x1]
    %v220 = vld [vmem:[#allocation2 + $0x6d] sm:$0x1]
    %v221 = vld [vmem:[#allocation2 + $0x75] sm:$0x1]
    %v222 = vld [vmem:[#allocation2 + $0x7d] sm:$0x1]
    %v223 = vmax.f32 %v191, %v207
    %v224 = vmax.f32 %v192, %v208
    %v225 = vmax.f32 %v193, %v209
    %v226 = vmax.f32 %v194, %v210
    %v227 = vmax.f32 %v195, %v211
    %v228 = vmax.f32 %v196, %v212
    %v229 = vmax.f32 %v197, %v213
    %v230 = vmax.f32 %v198, %v214
    %v231 = vmax.f32 %v199, %v215
    %v232 = vmax.f32 %v200, %v216
    %v233 = vmax.f32 %v201, %v217
    %v234 = vmax.f32 %v202, %v218
    %v235 = vmax.f32 %v203, %v219
    %v236 = vmax.f32 %v204, %v220
    %v237 = vmax.f32 %v205, %v221
    %v238 = vmax.f32 %v206, %v222
    %v239 = vld [vmem:[#allocation2 + $0x6] sm:$0x1]
    %v240 = vld [vmem:[#allocation2 + $0xe] sm:$0x1]
    %v241 = vld [vmem:[#allocation2 + $0x16] sm:$0x1]
    %v242 = vld [vmem:[#allocation2 + $0x1e] sm:$0x1]
    %v243 = vld [vmem:[#allocation2 + $0x26] sm:$0x1]
    %v244 = vld [vmem:[#allocation2 + $0x2e] sm:$0x1]
    %v245 = vld [vmem:[#allocation2 + $0x36] sm:$0x1]
    %v246 = vld [vmem:[#allocation2 + $0x3e] sm:$0x1]
    %v247 = vld [vmem:[#allocation2 + $0x46] sm:$0x1]
    %v248 = vld [vmem:[#allocation2 + $0x4e] sm:$0x1]
    %v249 = vld [vmem:[#allocation2 + $0x56] sm:$0x1]
    %v250 = vld [vmem:[#allocation2 + $0x5e] sm:$0x1]
    %v251 = vld [vmem:[#allocation2 + $0x66] sm:$0x1]
    %v252 = vld [vmem:[#allocation2 + $0x6e] sm:$0x1]
    %v253 = vld [vmem:[#allocation2 + $0x76] sm:$0x1]
    %v254 = vld [vmem:[#allocation2 + $0x7e] sm:$0x1]
    %v255 = vmax.f32 %v223, %v239
    %v256 = vmax.f32 %v224, %v240
    %v257 = vmax.f32 %v225, %v241
    %v258 = vmax.f32 %v226, %v242
    %v259 = vmax.f32 %v227, %v243
    %v260 = vmax.f32 %v228, %v244
    %v261 = vmax.f32 %v229, %v245
    %v262 = vmax.f32 %v230, %v246
    %v263 = vmax.f32 %v231, %v247
    %v264 = vmax.f32 %v232, %v248
    %v265 = vmax.f32 %v233, %v249
    %v266 = vmax.f32 %v234, %v250
    %v267 = vmax.f32 %v235, %v251
    %v268 = vmax.f32 %v236, %v252
    %v269 = vmax.f32 %v237, %v253
    %v270 = vmax.f32 %v238, %v254
    %v271 = vld [vmem:[#allocation2 + $0x7] sm:$0x1]
    %v272 = vld [vmem:[#allocation2 + $0xf] sm:$0x1]
    %v273 = vld [vmem:[#allocation2 + $0x17] sm:$0x1]
    %v274 = vld [vmem:[#allocation2 + $0x1f] sm:$0x1]
    %v275 = vld [vmem:[#allocation2 + $0x27] sm:$0x1]
    %v276 = vld [vmem:[#allocation2 + $0x2f] sm:$0x1]
    %v277 = vld [vmem:[#allocation2 + $0x37] sm:$0x1]
    %v278 = vld [vmem:[#allocation2 + $0x3f] sm:$0x1]
    %v279 = vld [vmem:[#allocation2 + $0x47] sm:$0x1]
    %v280 = vld [vmem:[#allocation2 + $0x4f] sm:$0x1]
    %v281 = vld [vmem:[#allocation2 + $0x57] sm:$0x1]
    %v282 = vld [vmem:[#allocation2 + $0x5f] sm:$0x1]
    %v283 = vld [vmem:[#allocation2 + $0x67] sm:$0x1]
    %v284 = vld [vmem:[#allocation2 + $0x6f] sm:$0x1]
    %v285 = vld [vmem:[#allocation2 + $0x77] sm:$0x1]
    %v286 = vld [vmem:[#allocation2 + $0x7f] sm:$0x1]
    %v287 = vmax.f32 %v255, %v271
    %v288 = vmax.f32 %v256, %v272
    %v289 = vmax.f32 %v257, %v273
    %v290 = vmax.f32 %v258, %v274
    %v291 = vmax.f32 %v259, %v275
    %v292 = vmax.f32 %v260, %v276
    %v293 = vmax.f32 %v261, %v277
    %v294 = vmax.f32 %v262, %v278
    %v295 = vmax.f32 %v263, %v279
    %v296 = vmax.f32 %v264, %v280
    %v297 = vmax.f32 %v265, %v281
    %v298 = vmax.f32 %v266, %v282
    %v299 = vmax.f32 %v267, %v283
    %v300 = vmax.f32 %v268, %v284
    %v301 = vmax.f32 %v269, %v285
    %v302 = vmax.f32 %v270, %v286
    %v303 = vpack.c.bf16 %v287, %v287
    %v304 = vpack.c.bf16 %v288, %v288
    %v305 = vpack.c.bf16 %v289, %v289
    %v306 = vpack.c.bf16 %v290, %v290
    %v307 = vpack.c.bf16 %v291, %v291
    %v308 = vpack.c.bf16 %v292, %v292
    %v309 = vpack.c.bf16 %v293, %v293
    %v310 = vpack.c.bf16 %v294, %v294
    %v311 = vpack.c.bf16 %v295, %v295
    %v312 = vpack.c.bf16 %v296, %v296
    %v313 = vpack.c.bf16 %v297, %v297
    %v314 = vpack.c.bf16 %v298, %v298
    %v315 = vpack.c.bf16 %v299, %v299
    %v316 = vpack.c.bf16 %v300, %v300
    %v317 = vpack.c.bf16 %v301, %v301
    %v318 = vpack.c.bf16 %v302, %v302
    %v319 = vld [vmem:[#allocation5] sm:$0xf]
    %v320 = vld [vmem:[#allocation5 + $0x4] sm:$0xf]
    %v321 = vld [vmem:[#allocation5 + $0x8] sm:$0xf]
    %v322 = vld [vmem:[#allocation5 + $0xc] sm:$0xf]
    %v323 = vld [vmem:[%s2] sm:$0x1]
    %v325 = vlaneseq
    %v326 = vshrl.u32 %v325, 7
    %v327 = vsub.s32 0, %v326
    %v328 = vrot.slane %v323, %v327
    %v346 = vunpack.c.l.b16 %v303
    %v347 = vunpack.c.l.b16 %v304
    %v348 = vunpack.c.l.b16 %v305
    %v349 = vunpack.c.l.b16 %v306
    %v350 = vunpack.c.l.b16 %v307
    %v351 = vunpack.c.l.b16 %v308
    %v352 = vunpack.c.l.b16 %v309
    %v353 = vunpack.c.l.b16 %v310
    %v354 = vunpack.c.l.b16 %v311
    %v355 = vunpack.c.l.b16 %v312
    %v356 = vunpack.c.l.b16 %v313
    %v357 = vunpack.c.l.b16 %v314
    %v358 = vunpack.c.l.b16 %v315
    %v359 = vunpack.c.l.b16 %v316
    %v360 = vunpack.c.l.b16 %v317
    %v361 = vunpack.c.l.b16 %v318
    %v362 = vrot.slane %v347, 7
    %vm363 = vcmask 1041409
    %v364 = vsel %vm363, %v362, %v346
    %v365 = vrot.slane %v348, 6
    %vm366 = vcmask 1042434
    %v367 = vsel %vm366, %v365, %v364
    %v368 = vrot.slane %v349, 5
    %vm369 = vcmask 1043459
    %v370 = vsel %vm369, %v368, %v367
    %v371 = vrot.slane %v350, 4
    %vm372 = vcmask 1044484
    %v373 = vsel %vm372, %v371, %v370
    %v374 = vrot.slane %v351, 3
    %vm375 = vcmask 1045509
    %v376 = vsel %vm375, %v374, %v373
    %v377 = vrot.slane %v352, 2
    %vm378 = vcmask 1046534
    %v379 = vsel %vm378, %v377, %v376
    %v380 = vrot.slane %v353, 1
    %vm381 = vcmask 1047559
    %v382 = vsel %vm381, %v380, %v379
    %v383 = vrot.slane %v355, 7
    %v384 = vsel %vm363, %v383, %v354
    %v385 = vrot.slane %v356, 6
    %v386 = vsel %vm366, %v385, %v384
    %v387 = vrot.slane %v357, 5
    %v388 = vsel %vm369, %v387, %v386
    %v389 = vrot.slane %v358, 4
    %v390 = vsel %vm372, %v389, %v388
    %v391 = vrot.slane %v359, 3
    %v392 = vsel %vm375, %v391, %v390
    %v393 = vrot.slane %v360, 2
    %v394 = vsel %vm378, %v393, %v392
    %v395 = vrot.slane %v361, 1
    %v396 = vsel %vm381, %v395, %v394
    %v397 = vpack.c.b16 %v396, %v382
    %v402 = vunpack.c.l.b16 %v319
    %v403 = vunpack.c.l.b16 %v320
    %v404 = vunpack.c.l.b16 %v321
    %v405 = vunpack.c.l.b16 %v322
    %v406 = vpack.c.b16 %v403, %v402
    %v407 = vpack.c.b16 %v405, %v404
    %vm410 = vcmask 261120
    %v412 = vsel %vm410, %v397, 0
    %414 = vmatprep.subr.bf16.mxu0 0
    %415 = vmatpush1.bf16.msra.mxu0 %v406
    %416 = vmatprep.subr.bf16.mxu0 0
    %417 = vmatpush1.bf16.msra.mxu0 %v407
    %418 = vmatprep.subr.bf16.mxu0 0
    %419 = vmatpush1.bf16.msra.mxu0 0
    %420 = vmatprep.subr.bf16.mxu0 0
    %421 = vmatpush1.bf16.msra.mxu0 0
    %422 = vmatprep.subr.bf16.mxu0 0
    %423 = vmatpush1.bf16.msra.mxu0 0
    %424 = vmatprep.subr.bf16.mxu0 0
    %425 = vmatpush1.bf16.msra.mxu0 0
    %426 = vmatprep.subr.bf16.mxu0 0
    %427 = vmatpush1.bf16.msra.mxu0 0
    %428 = vmatprep.subr.bf16.mxu0 0
    %429 = vmatpush1.bf16.msra.mxu0 0
    %430 = vmatprep.subr.bf16.mxu0 0
    %431 = vmatpush1.bf16.msra.mxu0 0
    %432 = vmatprep.subr.bf16.mxu0 0
    %433 = vmatpush1.bf16.msra.mxu0 0
    %434 = vmatprep.subr.bf16.mxu0 0
    %435 = vmatpush1.bf16.msra.mxu0 0
    %436 = vmatprep.subr.bf16.mxu0 0
    %437 = vmatpush1.bf16.msra.mxu0 0
    %438 = vmatprep.subr.bf16.mxu0 0
    %439 = vmatpush1.bf16.msra.mxu0 0
    %440 = vmatprep.subr.bf16.mxu0 0
    %441 = vmatpush1.bf16.msra.mxu0 0
    %442 = vmatprep.subr.bf16.mxu0 0
    %443 = vmatpush1.bf16.msra.mxu0 0
    %444 = vmatprep.subr.bf16.mxu0 0
    %445 = vmatpush1.bf16.msra.mxu0 0
    %446 = vmatprep.mubr.bf16.mxu0 0
    %447 = vmatmul.mubr.bf16.gmra.mrb[0].mxu0 %v412
    %v448 = vpop.f32.mrb[0].mxu0
    %v449 = vadd.f32 %v328, %v448
    %v450 = vpop.f32.mrb[0].mxu0
    %v451 = vpop.f32.mrb[0].mxu0
    %v452 = vadd.f32 %v328, %v451
    %v453 = vpop.f32.mrb[0].mxu0
    %454 = vdwg.mxu0
    %v455 = vmax.f32 %v449, 0.0
    %v456 = vmax.f32 %v452, 0.0
    %v457 = vpack.c.bf16 %v456, %v455
    %v458 = vld [vmem:[#allocation7] sm:$0xf]
    %v459 = vld [vmem:[#allocation7 + $0x4] sm:$0xf]
    %v460 = vld [vmem:[#allocation7 + $0x8] sm:$0xf]
    %v461 = vld [vmem:[#allocation7 + $0xc] sm:$0xf]
    %v462 = vld [vmem:[#allocation7 + $0x10] sm:$0xf]
    %v463 = vld [vmem:[#allocation7 + $0x14] sm:$0xf]
    %v464 = vld [vmem:[#allocation7 + $0x18] sm:$0xf]
    %v465 = vld [vmem:[#allocation7 + $0x1c] sm:$0xf]
    %v466 = vld [vmem:[#allocation7 + $0x20] sm:$0xf]
    %v467 = vld [vmem:[#allocation7 + $0x24] sm:$0xf]
    %v468 = vld [vmem:[#allocation7 + $0x28] sm:$0xf]
    %v469 = vld [vmem:[#allocation7 + $0x2c] sm:$0xf]
    %v470 = vld [vmem:[#allocation7 + $0x30] sm:$0xf]
    %v471 = vld [vmem:[#allocation7 + $0x34] sm:$0xf]
    %v472 = vld [vmem:[#allocation7 + $0x38] sm:$0xf]
    %v473 = vld [vmem:[#allocation7 + $0x3c] sm:$0xf]
    %v474 = vld [vmem:[%s4] sm:$0x1]
    %v476 = vlaneseq
    %v477 = vshrl.u32 %v476, 7
    %v478 = vsub.s32 0, %v477
    %v479 = vrot.slane %v474, %v478
    %v497 = vunpack.c.l.b16 %v458
    %v498 = vunpack.c.l.b16 %v459
    %v499 = vunpack.c.l.b16 %v460
    %v500 = vunpack.c.l.b16 %v461
    %v501 = vunpack.c.l.b16 %v462
    %v502 = vunpack.c.l.b16 %v463
    %v503 = vunpack.c.l.b16 %v464
    %v504 = vunpack.c.l.b16 %v465
    %v505 = vunpack.c.l.b16 %v466
    %v506 = vunpack.c.l.b16 %v467
    %v507 = vunpack.c.l.b16 %v468
    %v508 = vunpack.c.l.b16 %v469
    %v509 = vunpack.c.l.b16 %v470
    %v510 = vunpack.c.l.b16 %v471
    %v511 = vunpack.c.l.b16 %v472
    %v512 = vunpack.c.l.b16 %v473
    %v513 = vpack.c.b16 %v498, %v497
    %v514 = vpack.c.b16 %v500, %v499
    %v515 = vpack.c.b16 %v502, %v501
    %v516 = vpack.c.b16 %v504, %v503
    %v517 = vpack.c.b16 %v506, %v505
    %v518 = vpack.c.b16 %v508, %v507
    %v519 = vpack.c.b16 %v510, %v509
    %v520 = vpack.c.b16 %v512, %v511
    %529 = vmatprep.subr.bf16.mxu0 0
    %530 = vmatpush1.bf16.msra.mxu0 %v513
    %531 = vmatprep.subr.bf16.mxu0 0
    %532 = vmatpush1.bf16.msra.mxu0 %v514
    %533 = vmatprep.subr.bf16.mxu0 0
    %534 = vmatpush1.bf16.msra.mxu0 %v515
    %535 = vmatprep.subr.bf16.mxu0 0
    %536 = vmatpush1.bf16.msra.mxu0 %v516
    %537 = vmatprep.subr.bf16.mxu0 0
    %538 = vmatpush1.bf16.msra.mxu0 %v517
    %539 = vmatprep.subr.bf16.mxu0 0
    %540 = vmatpush1.bf16.msra.mxu0 %v518
    %541 = vmatprep.subr.bf16.mxu0 0
    %542 = vmatpush1.bf16.msra.mxu0 %v519
    %543 = vmatprep.subr.bf16.mxu0 0
    %544 = vmatpush1.bf16.msra.mxu0 %v520
    %545 = vmatprep.subr.bf16.mxu0 0
    %546 = vmatpush1.bf16.msra.mxu0 0
    %547 = vmatprep.subr.bf16.mxu0 0
    %548 = vmatpush1.bf16.msra.mxu0 0
    %549 = vmatprep.subr.bf16.mxu0 0
    %550 = vmatpush1.bf16.msra.mxu0 0
    %551 = vmatprep.subr.bf16.mxu0 0
    %552 = vmatpush1.bf16.msra.mxu0 0
    %553 = vmatprep.subr.bf16.mxu0 0
    %554 = vmatpush1.bf16.msra.mxu0 0
    %555 = vmatprep.subr.bf16.mxu0 0
    %556 = vmatpush1.bf16.msra.mxu0 0
    %557 = vmatprep.subr.bf16.mxu0 0
    %558 = vmatpush1.bf16.msra.mxu0 0
    %559 = vmatprep.subr.bf16.mxu0 0
    %560 = vmatpush1.bf16.msra.mxu0 0
    %561 = vmatprep.mubr.bf16.mxu0 0
    %562 = vmatmul.mubr.bf16.gmra.mrb[0].mxu0 %v457
    %v563 = vpop.f32.mrb[0].mxu0
    %v564 = vadd.f32 %v479, %v563
    %v565 = vpop.f32.mrb[0].mxu0
    %v566 = vpop.f32.mrb[0].mxu0
    %v567 = vadd.f32 %v479, %v566
    %v568 = vpop.f32.mrb[0].mxu0
    %569 = vdwg.mxu0
    %570 = vst [vmem:[#allocation8] sm:$0xff] %v564
    %571 = vst [vmem:[#allocation8 + $0x8] sm:$0xff] %v567
    // Predicated region
    $region34: #{tpu_custom_call.1} parent=1 // pred_check
      _
    $region35: #{tpu_custom_call.1} parent=1 // pred_check_branch
      %573 = sbr.rel (0) target = $region37
    $region36: #{tpu_custom_call.1} parent=1 // pred_region
      %s575 = ssub.s32 256, 256
      %576 = vsyncadd [#allocation4], %s575
      %s577 = sshll.u32 [#allocation8], 4
      %s578 = int_to_ptr.vmem [resolvable:$true] %s577
      %583 = dma.vmem_to_hbm [thread:$0]  %s578, 256, %s5, [#allocation4], 128, 128, 8
    $region37: #{tpu_custom_call.1} parent=1 // pred_fallthru
      _
    // Predicated region
    $region38: #{tpu_custom_call.1} parent=1 // pred_check
      _
    $region39: #{tpu_custom_call.1} parent=1 // pred_check_branch
      %585 = sbr.rel (0) target = $region41
    $region40: #{tpu_custom_call.1} parent=1 // pred_region
      %586 = dma.done [#allocation4], 256
    $region41: #{tpu_custom_call.1} parent=1 // pred_fallthru
      _
    %587 = vsyncpa [#allocation3], 1
    %588 = vsyncpa [#allocation6], 1
    %589 = vsyncpa [#allocation4], 1

</llo_original>
